<compile_context>
chip_gen: v7x
topology: tpu7x:2x2x1
jax: 0.10.0
libtpu: 0.0.40
codegen_flags: <defaults>
</compile_context>

<pallas_src>
import functools
import math

import jax
import jax.numpy as jnp
from jax.experimental import pallas as pl
from jax.experimental.pallas import tpu as pltpu

_LANE = 128


def _round_up(x, m):
    return ((x + m - 1) // m) * m


def _lcm(a, b):
    return a * b // math.gcd(a, b)


# ----------------------------------------------------------------------------
# Kernel: one SAGEConv layer, K-tiled aggregation + fused epilogue
# ----------------------------------------------------------------------------
def _sage_layer_kernel(a_ref, x_ref, xr_ref, invd_ref, wl_ref, wr_ref, b_ref,
                       *rest, kind):
    """Grid = (row_tiles, k_tiles).  Accumulates (int8->bf16 A_tile) @ X_ktile
    into an f32 scratch; at the last K step applies the 1/deg scale, the weight
    matmuls, the bias and the layer-specific epilogue (relu / pre-act+relu /
    masked log_softmax)."""
    out_refs, acc_ref = rest[:-1], rest[-1]
    k = pl.program_id(1)

    @pl.when(k == 0)
    def _init():
        acc_ref[...] = jnp.zeros_like(acc_ref)

    # Neighborhood-sum partial: (tn, tk)bf16 @ (tk, Fin)bf16 -> f32 MXU accum.
    # Counts are small integers, so the int8 -> bf16 cast is exact.
    acc_ref[...] += jnp.dot(a_ref[...].astype(jnp.bfloat16), x_ref[...],
                            preferred_element_type=jnp.float32)

    @pl.when(k == pl.num_programs(1) - 1)
    def _finalize():
        agg = acc_ref[...] * invd_ref[...]          # exact f32 mean aggregation
        y = jnp.dot(agg, wl_ref[...], preferred_element_type=jnp.float32)
        y = y + jnp.dot(xr_ref[...].astype(jnp.float32), wr_ref[...],
                        preferred_element_type=jnp.float32)
        y = y + b_ref[...]
        if kind == "hidden_out":          # last hidden layer: f32 pre-act + bf16 relu
            out_refs[0][...] = y.astype(out_refs[0].dtype)
            out_refs[1][...] = jnp.maximum(y, 0.0).astype(out_refs[1].dtype)
        elif kind == "hidden":            # earlier hidden layers: bf16 relu only
            out_refs[0][...] = jnp.maximum(y, 0.0).astype(out_refs[0].dtype)
        else:                             # "final": fused (masked) log_softmax, f32
            m = jnp.max(y, axis=-1, keepdims=True)
            s = y - m
            lse = jnp.log(jnp.sum(jnp.exp(s), axis=-1, keepdims=True))
            out_refs[0][...] = (s - lse).astype(out_refs[0].dtype)


# ----------------------------------------------------------------------------
# pallas_call wrapper for one layer
# ----------------------------------------------------------------------------
def _sage_layer(A, x, inv_deg, wl, bl, wr, *, kind, tn, tk, vmem_limit_bytes):
    n_pad, fin = x.shape
    assert A.shape == (n_pad, n_pad) and A.dtype == jnp.int8
    assert x.dtype == jnp.bfloat16
    assert inv_deg.shape == (n_pad, 1)
    assert n_pad % tn == 0 and n_pad % tk == 0
    fout = wl.shape[1]
    fout_pad = _round_up(fout, _LANE)
    pad = fout_pad - fout

    # Lane-pad weights/bias to 128 columns (zero weight cols; -1e30 bias cols
    # for the final layer so padded classes drop out of the softmax).
    wl_p = jnp.pad(wl.astype(jnp.float32), ((0, 0), (0, pad)))
    wr_p = jnp.pad(wr.astype(jnp.float32), ((0, 0), (0, pad)))
    bias_pad_val = -1e30 if kind == "final" else 0.0
    bl_p = jnp.pad(bl.astype(jnp.float32), ((0, 0), (0, pad)),
                   constant_values=bias_pad_val)

    grid = (n_pad // tn, n_pad // tk)
    in_specs = [
        pl.BlockSpec((tn, tk), lambda i, k: (i, k)),           # A tile (int8 counts)
        pl.BlockSpec((tk, fin), lambda i, k: (k, 0)),           # X K-tile (bf16)
        pl.BlockSpec((tn, fin), lambda i, k: (i, 0)),           # X root-row tile (bf16)
        pl.BlockSpec((tn, 1), lambda i, k: (i, 0)),             # 1/deg row tile (f32)
        pl.BlockSpec((fin, fout_pad), lambda i, k: (0, 0)),     # W_l (lane-padded)
        pl.BlockSpec((fin, fout_pad), lambda i, k: (0, 0)),     # W_r (lane-padded)
        pl.BlockSpec((1, fout_pad), lambda i, k: (0, 0)),       # bias (lane-padded)
    ]
    out_block = pl.BlockSpec((tn, fout_pad), lambda i, k: (i, 0))
    if kind == "hidden_out":
        out_shape = (jax.ShapeDtypeStruct((n_pad, fout_pad), jnp.float32),   # pre-act
                     jax.ShapeDtypeStruct((n_pad, fout_pad), jnp.bfloat16))  # relu
        out_specs = [out_block, out_block]
    elif kind == "hidden":
        out_shape = jax.ShapeDtypeStruct((n_pad, fout_pad), jnp.bfloat16)
        out_specs = out_block
    else:  # final
        out_shape = jax.ShapeDtypeStruct((n_pad, fout_pad), jnp.float32)
        out_specs = out_block

    kern = functools.partial(_sage_layer_kernel, kind=kind)
    return pl.pallas_call(
        kern,
        out_shape=out_shape,
        grid_spec=pltpu.PrefetchScalarGridSpec(
            num_scalar_prefetch=0,
            grid=grid,
            in_specs=in_specs,
            out_specs=out_specs,
            scratch_shapes=[pltpu.VMEM((tn, fin), jnp.float32)],  # A@X accumulator
        ),
        compiler_params=pltpu.CompilerParams(
            dimension_semantics=("parallel", "arbitrary"),
            vmem_limit_bytes=vmem_limit_bytes,
        ),
    )(A, x, x, inv_deg, wl_p, wr_p, bl_p)


# ----------------------------------------------------------------------------
# Glue: adjacency build, parameter init, full forward
# ----------------------------------------------------------------------------
def build_adjacency(edge_index, num_nodes, n_pad=None):
    """int8 edge-count adjacency + f32 inverse degree so that
    (A @ X) * inv_deg == mean_{j in N(i)} x_j (duplicate edges counted, matching
    PyG scatter-mean).  edge_index[0] = sources (messages), edge_index[1] = dests.
    Padded rows/columns (>= num_nodes) stay zero.  Counts are assumed < 128."""
    n_pad = num_nodes if n_pad is None else n_pad
    src, dst = edge_index[0], edge_index[1]
    counts = jnp.zeros((n_pad, n_pad), jnp.float32).at[dst, src].add(1.0)
    deg = jnp.sum(counts, axis=1, keepdims=True)
    inv_deg = 1.0 / jnp.maximum(deg, 1.0)     # isolated nodes -> zero aggregation
    return counts.astype(jnp.int8), inv_deg


def init_sage_params(key, in_channels, hidden_channels, out_channels, num_layers):
    """Deterministic synthetic weights.  Per SAGEConv: W_l (Fin,Fout), b_l (1,Fout),
    W_r (Fin,Fout) — stored already transposed for right-multiplication X @ W."""
    dims = [in_channels] + [hidden_channels] * (num_layers - 1) + [out_channels]
    params = []
    for l in range(num_layers):
        fin, fout = dims[l], dims[l + 1]
        key, k1, k2 = jax.random.split(key, 3)
        scale = 1.0 / jnp.sqrt(jnp.float32(fin))
        wl = jax.random.normal(k1, (fin, fout), jnp.float32) * scale
        wr = jax.random.normal(k2, (fin, fout), jnp.float32) * scale
        bl = jnp.zeros((1, fout), jnp.float32)
        params.append((wl, bl, wr))
    return params


def sage_forward(x, edge_index, params, *, tn=1024, tk=2048,
                 vmem_limit_bytes=48 * 1024 * 1024):
    """Returns (log_softmax(last_conv), out, g) exactly like SAGE.forward (eval)."""
    n, _ = x.shape
    assert tn % 8 == 0 and tk % _LANE == 0, \
        "tn must be a multiple of 8 and tk a multiple of 128"
    # Clamp tiles for tiny test graphs, then pad N so both tiles divide it
    # (never collapse tiles via gcd).  On v7x keep n_pad/tn >= 4-8 for megacore.
    n_align = _round_up(n, _LANE)
    tn_eff = min(tn, n_align)
    tk_eff = min(tk, n_align)
    n_pad = _round_up(n, _lcm(tn_eff, tk_eff))

    # 1-byte adjacency counts (dominant HBM stream) + exact f32 inverse degree;
    # bf16 node features / activations, row-padded with zeros.
    A, inv_deg = build_adjacency(edge_index, n, n_pad)
    x_cur = jnp.pad(x.astype(jnp.bfloat16), ((0, n_pad - n), (0, 0)))

    num_layers = len(params)
    assert num_layers >= 2
    out_pre = None
    for l, (wl, bl, wr) in enumerate(params[:-1]):
        fout = wl.shape[1]
        # Only the last hidden layer's pre-activation is live in the module.
        kind = "hidden_out" if l == num_layers - 2 else "hidden"
        res = _sage_layer(A, x_cur, inv_deg, wl, bl, wr, kind=kind,
                          tn=tn_eff, tk=tk_eff, vmem_limit_bytes=vmem_limit_bytes)
        if kind == "hidden_out":
            out_full, act_full = res
            out_pre = out_full[:n, :fout]        # f32 pre-activation
        else:
            act_full = res
        x_cur = act_full[:, :fout]               # bf16, lane padding dropped
        # F.dropout(p, training=False) is the identity in eval mode.
    g = x_cur[:n].astype(jnp.float32)            # what actually feeds the last conv
    wl, bl, wr = params[-1]
    lsm_full = _sage_layer(A, x_cur, inv_deg, wl, bl, wr, kind="final",
                           tn=tn_eff, tk=tk_eff, vmem_limit_bytes=vmem_limit_bytes)
    logp = lsm_full[:n, :wl.shape[1]]
    return logp, out_pre, g


# ----------------------------------------------------------------------------
# Pure-JAX reference (mirrors the kernel's bf16 aggregation / activations)
# ----------------------------------------------------------------------------
def sage_forward_ref(x, edge_index, params):
    n = x.shape[0]
    A_i8, inv_deg = build_adjacency(edge_index, n)
    A_bf = A_i8.astype(jnp.bfloat16)             # exact for small counts
    xc = x.astype(jnp.bfloat16)
    out = None
    for (wl, bl, wr) in params[:-1]:
        agg = jnp.dot(A_bf, xc, preferred_element_type=jnp.float32) * inv_deg
        out = agg @ wl + xc.astype(jnp.float32) @ wr + bl
        xc = jnp.maximum(out, 0.0).astype(jnp.bfloat16)
    g = xc.astype(jnp.float32)
    wl, bl, wr = params[-1]
    agg = jnp.dot(A_bf, xc, preferred_element_type=jnp.float32) * inv_deg
    y = agg @ wl + xc.astype(jnp.float32) @ wr + bl
    return jax.nn.log_softmax(y, axis=-1), out, g


# ----------------------------------------------------------------------------
if __name__ == "__main__":
    # Small synthetic graph consistent with the module:
    #   in_channels=16, hidden_channels=32, num_classes=8, num_layers=3
    N, E = 128, 512
    IN_C, HID_C, OUT_C, NUM_LAYERS = 16, 32, 8, 3

    key = jax.random.PRNGKey(0)
    kx, ke, kp = jax.random.split(key, 3)

    x = jax.random.normal(kx, (N, IN_C), jnp.float32)
    edge_index = jax.random.randint(ke, (2, E), 0, N, dtype=jnp.int32)
    params = init_sage_params(kp, IN_C, HID_C, OUT_C, NUM_LAYERS)

    logp, out, g = sage_forward(x, edge_index, params)
    jax.block_until_ready((logp, out, g))

    logp_r, out_r, g_r = sage_forward_ref(x, edge_index, params)
    assert logp.shape == (N, OUT_C) and out.shape == (N, HID_C) and g.shape == (N, HID_C)
    assert jnp.allclose(logp, logp_r, atol=5e-4, rtol=5e-4)
    assert jnp.allclose(out, out_r, atol=5e-4, rtol=5e-4)
    assert jnp.allclose(g, g_r, atol=5e-4, rtol=5e-4)

    print("KERNEL_OK")
</pallas_src>

<mosaic_0001>
module attributes {stable_mosaic.version = 11 : i64} {
  func.func @_sage_layer_kernel(%arg0: i32, %arg1: i32, %arg2: memref<128x128xi8, #tpu.memory_space<vmem>>, %arg3: memref<128x16xbf16, #tpu.memory_space<vmem>>, %arg4: memref<128x16xbf16, #tpu.memory_space<vmem>>, %arg5: memref<128x1xf32, #tpu.memory_space<vmem>>, %arg6: memref<16x128xf32, #tpu.memory_space<vmem>>, %arg7: memref<16x128xf32, #tpu.memory_space<vmem>>, %arg8: memref<1x128xf32, #tpu.memory_space<vmem>>, %arg9: memref<128x128xbf16, #tpu.memory_space<vmem>>, %arg10: memref<128x16xf32, #tpu.memory_space<vmem>>) attributes {dimension_semantics = [#tpu.dimension_semantics<parallel>, #tpu.dimension_semantics<arbitrary>], iteration_bounds = array<i64: 1, 1>, scalar_prefetch = 0 : i64, scratch_operands = 1 : i64, tpu.core_type = #tpu.core_type<tc>, window_params = [{transform_indices = @transform_0, window_bounds = array<i64: 128, 128>}, {transform_indices = @transform_1, window_bounds = array<i64: 128, 16>}, {transform_indices = @transform_2, window_bounds = array<i64: 128, 16>}, {transform_indices = @transform_3, window_bounds = array<i64: 128, 1>}, {pipeline_mode = #tpu.pipeline_mode<synchronous>, transform_indices = @transform_4, window_bounds = array<i64: 16, 128>}, {pipeline_mode = #tpu.pipeline_mode<synchronous>, transform_indices = @transform_5, window_bounds = array<i64: 16, 128>}, {pipeline_mode = #tpu.pipeline_mode<synchronous>, transform_indices = @transform_6, window_bounds = array<i64: 1, 128>}, {transform_indices = @transform_7, window_bounds = array<i64: 128, 128>}]} {
    %c0_i32 = arith.constant 0 : i32
    %0 = arith.cmpi eq, %arg1, %c0_i32 : i32
    %1 = arith.extui %0 : i1 to i32
    %c0_i32_0 = arith.constant 0 : i32
    %2 = arith.cmpi ne, %1, %c0_i32_0 : i32
    scf.if %2 {
      %cst_10 = arith.constant 0.000000e+00 : f32
      %13 = vector.broadcast %cst_10 : f32 to vector<128x16xf32>
      %c0_11 = arith.constant 0 : index
      %c0_12 = arith.constant 0 : index
      %14 = vector.load %arg10[%c0_11, %c0_12] : memref<128x16xf32, #tpu.memory_space<vmem>>, vector<128x16xf32>
      tpu.vector_store %arg10[%c0_11, %c0_12], %13 {strides = array<i32>} : memref<128x16xf32, #tpu.memory_space<vmem>>, vector<128x16xf32>,
    } else {
    }
    %c0 = arith.constant 0 : index
    %c0_1 = arith.constant 0 : index
    %3 = vector.load %arg10[%c0, %c0_1] : memref<128x16xf32, #tpu.memory_space<vmem>>, vector<128x16xf32>
    %c0_2 = arith.constant 0 : index
    %c0_3 = arith.constant 0 : index
    %4 = vector.load %arg2[%c0_2, %c0_3] : memref<128x128xi8, #tpu.memory_space<vmem>>, vector<128x128xi8>
    %5 = arith.sitofp %4 : vector<128x128xi8> to vector<128x128xbf16>
    %c0_4 = arith.constant 0 : index
    %c0_5 = arith.constant 0 : index
    %6 = vector.load %arg3[%c0_4, %c0_5] : memref<128x16xbf16, #tpu.memory_space<vmem>>, vector<128x16xbf16>
    %cst = arith.constant dense<0.000000e+00> : vector<128x16xf32>
    %7 = tpu.matmul %5, %6, %cst {dimension_numbers = #tpu.dot_dimension_numbers<[1], [0], [0], [1], [0, 0, 1, 1], [], []>} : vector<128x128xbf16>, vector<128x16xbf16>, vector<128x16xf32> -> vector<128x16xf32>
    %8 = arith.addf %3, %7 : vector<128x16xf32>
    %c0_6 = arith.constant 0 : index
    %c0_7 = arith.constant 0 : index
    %9 = vector.load %arg10[%c0_6, %c0_7] : memref<128x16xf32, #tpu.memory_space<vmem>>, vector<128x16xf32>
    tpu.vector_store %arg10[%c0_6, %c0_7], %8 {strides = array<i32>} : memref<128x16xf32, #tpu.memory_space<vmem>>, vector<128x16xf32>,
    %c0_i32_8 = arith.constant 0 : i32
    %10 = arith.cmpi eq, %arg1, %c0_i32_8 : i32
    %11 = arith.extui %10 : i1 to i32
    %c0_i32_9 = arith.constant 0 : i32
    %12 = arith.cmpi ne, %11, %c0_i32_9 : i32
    scf.if %12 {
      %c0_10 = arith.constant 0 : index
      %c0_11 = arith.constant 0 : index
      %13 = vector.load %arg10[%c0_10, %c0_11] : memref<128x16xf32, #tpu.memory_space<vmem>>, vector<128x16xf32>
      %c0_12 = arith.constant 0 : index
      %c0_13 = arith.constant 0 : index
      %14 = vector.load %arg5[%c0_12, %c0_13] : memref<128x1xf32, #tpu.memory_space<vmem>>, vector<128x1xf32>
      %15 = vector.broadcast %14 : vector<128x1xf32> to vector<128x16xf32>
      %16 = arith.mulf %13, %15 : vector<128x16xf32>
      %c0_14 = arith.constant 0 : index
      %c0_15 = arith.constant 0 : index
      %17 = vector.load %arg6[%c0_14, %c0_15] : memref<16x128xf32, #tpu.memory_space<vmem>>, vector<16x128xf32>
      %cst_16 = arith.constant dense<0.000000e+00> : vector<128x128xf32>
      %18 = tpu.matmul %16, %17, %cst_16 {dimension_numbers = #tpu.dot_dimension_numbers<[1], [0], [0], [1], [0, 0, 1, 1], [], []>} : vector<128x16xf32>, vector<16x128xf32>, vector<128x128xf32> -> vector<128x128xf32>
      %c0_17 = arith.constant 0 : index
      %c0_18 = arith.constant 0 : index
      %19 = vector.load %arg4[%c0_17, %c0_18] : memref<128x16xbf16, #tpu.memory_space<vmem>>, vector<128x16xbf16>
      %20 = arith.extf %19 : vector<128x16xbf16> to vector<128x16xf32>
      %c0_19 = arith.constant 0 : index
      %c0_20 = arith.constant 0 : index
      %21 = vector.load %arg7[%c0_19, %c0_20] : memref<16x128xf32, #tpu.memory_space<vmem>>, vector<16x128xf32>
      %cst_21 = arith.constant dense<0.000000e+00> : vector<128x128xf32>
      %22 = tpu.matmul %20, %21, %cst_21 {dimension_numbers = #tpu.dot_dimension_numbers<[1], [0], [0], [1], [0, 0, 1, 1], [], []>} : vector<128x16xf32>, vector<16x128xf32>, vector<128x128xf32> -> vector<128x128xf32>
      %23 = arith.addf %18, %22 : vector<128x128xf32>
      %c0_22 = arith.constant 0 : index
      %c0_23 = arith.constant 0 : index
      %24 = vector.load %arg8[%c0_22, %c0_23] : memref<1x128xf32, #tpu.memory_space<vmem>>, vector<1x128xf32>
      %25 = vector.broadcast %24 : vector<1x128xf32> to vector<128x128xf32>
      %26 = arith.addf %23, %25 : vector<128x128xf32>
      %cst_24 = arith.constant 0.000000e+00 : f32
      %27 = vector.broadcast %cst_24 : f32 to vector<128x128xf32>
      %28 = arith.maximumf %26, %27 : vector<128x128xf32>
      %29 = arith.truncf %28 : vector<128x128xf32> to vector<128x128xbf16>
      %c0_25 = arith.constant 0 : index
      %c0_26 = arith.constant 0 : index
      %30 = vector.load %arg9[%c0_25, %c0_26] : memref<128x128xbf16, #tpu.memory_space<vmem>>, vector<128x128xbf16>
      tpu.vector_store %arg9[%c0_25, %c0_26], %29 {strides = array<i32>} : memref<128x128xbf16, #tpu.memory_space<vmem>>, vector<128x128xbf16>,
    } else {
    }
    return
  }
  func.func @transform_0(%arg0: i32, %arg1: i32) -> (i32, i32) {
    %c0_i32 = arith.constant 0 : i32
    return %arg0, %arg1 : i32, i32
  }
  func.func @transform_1(%arg0: i32, %arg1: i32) -> (i32, i32) {
    %c0_i32 = arith.constant 0 : i32
    %c0_i32_0 = arith.constant 0 : i32
    return %arg1, %c0_i32 : i32, i32
  }
  func.func @transform_2(%arg0: i32, %arg1: i32) -> (i32, i32) {
    %c0_i32 = arith.constant 0 : i32
    %c0_i32_0 = arith.constant 0 : i32
    return %arg0, %c0_i32 : i32, i32
  }
  func.func @transform_3(%arg0: i32, %arg1: i32) -> (i32, i32) {
    %c0_i32 = arith.constant 0 : i32
    %c0_i32_0 = arith.constant 0 : i32
    return %arg0, %c0_i32 : i32, i32
  }
  func.func @transform_4(%arg0: i32, %arg1: i32) -> (i32, i32) {
    %c0_i32 = arith.constant 0 : i32
    %c0_i32_0 = arith.constant 0 : i32
    %c0_i32_1 = arith.constant 0 : i32
    return %c0_i32, %c0_i32_0 : i32, i32
  }
  func.func @transform_5(%arg0: i32, %arg1: i32) -> (i32, i32) {
    %c0_i32 = arith.constant 0 : i32
    %c0_i32_0 = arith.constant 0 : i32
    %c0_i32_1 = arith.constant 0 : i32
    return %c0_i32, %c0_i32_0 : i32, i32
  }
  func.func @transform_6(%arg0: i32, %arg1: i32) -> (i32, i32) {
    %c0_i32 = arith.constant 0 : i32
    %c0_i32_0 = arith.constant 0 : i32
    %c0_i32_1 = arith.constant 0 : i32
    return %c0_i32, %c0_i32_0 : i32, i32
  }
  func.func @transform_7(%arg0: i32, %arg1: i32) -> (i32, i32) {
    %c0_i32 = arith.constant 0 : i32
    %c0_i32_0 = arith.constant 0 : i32
    return %arg0, %c0_i32 : i32, i32
  }
}

</mosaic_0001>

<llo_original>
// kernel: tpu_custom_call.1
$region0: #{tpu_custom_call.1}
  #allocation0 [shape = 'u32[]', space=smem, size = 0x4, offset = 0x4, fixed_abs, tag = 'smem constant byte address 0x4 - core index']
  #allocation1 [shape = 'u32[144,128]{1,0:T(1,128)}', space=vmem, size = 0x12000, scoped, tag = 'internal scratch']
  #allocation2 [shape = 'f32[128,16]{1,0:T(8,128)}', space=vmem, size = 0x10000, scoped, tag = 'scratch operand']
  %s0 = inlined_call_operand.vmem [shape: s8[128,128], index: 0, kind: input, shape index: {}]
  %s1 = inlined_call_operand.vmem [shape: bf16[128,16], index: 1, kind: input, shape index: {}]
  %s2 = inlined_call_operand.vmem [shape: bf16[128,16], index: 2, kind: input, shape index: {}]
  %s3 = inlined_call_operand.vmem [shape: f32[128,1], index: 3, kind: input, shape index: {}]
  %s4 = inlined_call_operand.vmem [shape: f32[16,128], index: 4, kind: input, shape index: {}]
  %s5 = inlined_call_operand.vmem [shape: f32[16,128], index: 5, kind: input, shape index: {}]
  %s6 = inlined_call_operand.vmem [shape: f32[1,128], index: 6, kind: input, shape index: {}]
  %s7 = inlined_call_operand.hbm [shape: bf16[128,128], index: 7, kind: output, shape index: {}]
  %s8 = sld [smem:[#allocation0]]
  $region46: #{tpu_custom_call.1} parent=0
    _
  %s10 = ssub.s32 1, %s8
  %s11 = scalar_select 0, %s10, %s8
  $region1: #{tpu_custom_call.1} parent=0
    #allocation3 [shape = 'u8[32768]{0}', space=vmem, size = 0x8000, scoped, tag = 'output window, operand 0, single buffered']
    #allocation4 [shape = 's32[1]{0}', space=sflag, size = 0x4, scoped, tag = 'scoped memory for tpu_custom_call.1']
    %12 = vsyncpa [#allocation4], 0
    // Predicated region
    $region2: #{tpu_custom_call.1} parent=1 // pred_check
      _
    $region3: #{tpu_custom_call.1} parent=1 // pred_check_branch
      %14 = sbr.rel (0) target = $region5
    $region4: #{tpu_custom_call.1} parent=1 // pred_region
      _
    $region5: #{tpu_custom_call.1} parent=1 // pred_fallthru
      _
    // Predicated region
    $region6: #{tpu_custom_call.1} parent=1 // pred_check
      _
    $region7: #{tpu_custom_call.1} parent=1 // pred_check_branch
      %16 = sbr.rel (0) target = $region9
    $region8: #{tpu_custom_call.1} parent=1 // pred_region
      _
    $region9: #{tpu_custom_call.1} parent=1 // pred_fallthru
      _
    // Predicated region
    $region10: #{tpu_custom_call.1} parent=1 // pred_check
      _
    $region11: #{tpu_custom_call.1} parent=1 // pred_check_branch
      %18 = sbr.rel (0) target = $region13
    $region12: #{tpu_custom_call.1} parent=1 // pred_region
      _
    $region13: #{tpu_custom_call.1} parent=1 // pred_fallthru
      _
    // Predicated region
    $region14: #{tpu_custom_call.1} parent=1 // pred_check
      _
    $region15: #{tpu_custom_call.1} parent=1 // pred_check_branch
      %20 = sbr.rel (0) target = $region17
    $region16: #{tpu_custom_call.1} parent=1 // pred_region
      _
    $region17: #{tpu_custom_call.1} parent=1 // pred_fallthru
      _
    // Predicated region
    $region18: #{tpu_custom_call.1} parent=1 // pred_check
      _
    $region19: #{tpu_custom_call.1} parent=1 // pred_check_branch
      %22 = sbr.rel (0) target = $region21
    $region20: #{tpu_custom_call.1} parent=1 // pred_region
      _
    $region21: #{tpu_custom_call.1} parent=1 // pred_fallthru
      _
    // Predicated region
    $region22: #{tpu_custom_call.1} parent=1 // pred_check
      _
    $region23: #{tpu_custom_call.1} parent=1 // pred_check_branch
      %24 = sbr.rel (0) target = $region25
    $region24: #{tpu_custom_call.1} parent=1 // pred_region
      _
    $region25: #{tpu_custom_call.1} parent=1 // pred_fallthru
      _
    // Predicated region
    $region26: #{tpu_custom_call.1} parent=1 // pred_check
      _
    $region27: #{tpu_custom_call.1} parent=1 // pred_check_branch
      %26 = sbr.rel (0) target = $region29
    $region28: #{tpu_custom_call.1} parent=1 // pred_region
      _
    $region29: #{tpu_custom_call.1} parent=1 // pred_fallthru
      _
    %p28 = scmp.eq.s32.totalorder 0, 0
    // Predicated region
    $region30: #{tpu_custom_call.1} parent=1 // pred_check
      %p29 = pneg %p28
    $region31: #{tpu_custom_call.1} parent=1 // pred_check_branch
      %31 = sbr.rel (%p29) target = $region33
    $region32: #{tpu_custom_call.1} parent=1 // pred_region
      %vm32 = vcmask 130048
      %33 = vst.msk [vmem:[#allocation2] sm:$0xff] %vm32, 0.0
      %34 = vst.msk [vmem:[#allocation2 + $0x8] sm:$0xff] %vm32, 0.0
      %35 = vst.msk [vmem:[#allocation2 + $0x10] sm:$0xff] %vm32, 0.0
      %36 = vst.msk [vmem:[#allocation2 + $0x18] sm:$0xff] %vm32, 0.0
      %37 = vst.msk [vmem:[#allocation2 + $0x20] sm:$0xff] %vm32, 0.0
      %38 = vst.msk [vmem:[#allocation2 + $0x28] sm:$0xff] %vm32, 0.0
      %39 = vst.msk [vmem:[#allocation2 + $0x30] sm:$0xff] %vm32, 0.0
      %40 = vst.msk [vmem:[#allocation2 + $0x38] sm:$0xff] %vm32, 0.0
      %41 = vst.msk [vmem:[#allocation2 + $0x40] sm:$0xff] %vm32, 0.0
      %42 = vst.msk [vmem:[#allocation2 + $0x48] sm:$0xff] %vm32, 0.0
      %43 = vst.msk [vmem:[#allocation2 + $0x50] sm:$0xff] %vm32, 0.0
      %44 = vst.msk [vmem:[#allocation2 + $0x58] sm:$0xff] %vm32, 0.0
      %45 = vst.msk [vmem:[#allocation2 + $0x60] sm:$0xff] %vm32, 0.0
      %46 = vst.msk [vmem:[#allocation2 + $0x68] sm:$0xff] %vm32, 0.0
      %47 = vst.msk [vmem:[#allocation2 + $0x70] sm:$0xff] %vm32, 0.0
      %48 = vst.msk [vmem:[#allocation2 + $0x78] sm:$0xff] %vm32, 0.0
    $region33: #{tpu_custom_call.1} parent=1 // pred_fallthru
      _
    %v49 = vld [vmem:[#allocation2] sm:$0xff]
    %v50 = vld [vmem:[#allocation2 + $0x8] sm:$0xff]
    %v51 = vld [vmem:[#allocation2 + $0x10] sm:$0xff]
    %v52 = vld [vmem:[#allocation2 + $0x18] sm:$0xff]
    %v53 = vld [vmem:[#allocation2 + $0x20] sm:$0xff]
    %v54 = vld [vmem:[#allocation2 + $0x28] sm:$0xff]
    %v55 = vld [vmem:[#allocation2 + $0x30] sm:$0xff]
    %v56 = vld [vmem:[#allocation2 + $0x38] sm:$0xff]
    %v57 = vld [vmem:[#allocation2 + $0x40] sm:$0xff]
    %v58 = vld [vmem:[#allocation2 + $0x48] sm:$0xff]
    %v59 = vld [vmem:[#allocation2 + $0x50] sm:$0xff]
    %v60 = vld [vmem:[#allocation2 + $0x58] sm:$0xff]
    %v61 = vld [vmem:[#allocation2 + $0x60] sm:$0xff]
    %v62 = vld [vmem:[#allocation2 + $0x68] sm:$0xff]
    %v63 = vld [vmem:[#allocation2 + $0x70] sm:$0xff]
    %v64 = vld [vmem:[#allocation2 + $0x78] sm:$0xff]
    %v65 = vld [vmem:[%s0] sm:$0xff]
    %v66 = vld [vmem:[%s0 + $0x8] sm:$0xff]
    %v67 = vld [vmem:[%s0 + $0x10] sm:$0xff]
    %v68 = vld [vmem:[%s0 + $0x18] sm:$0xff]
    %v69 = vunpack.c.l.s8.bf16 %v65
    %v70 = vunpack.c.h.s8.bf16 %v65
    %v71 = vunpack.c.l.s8.bf16 %v66
    %v72 = vunpack.c.h.s8.bf16 %v66
    %v73 = vunpack.c.l.s8.bf16 %v67
    %v74 = vunpack.c.h.s8.bf16 %v67
    %v75 = vunpack.c.l.s8.bf16 %v68
    %v76 = vunpack.c.h.s8.bf16 %v68
    %v77 = vld [vmem:[%s1] sm:$0xf]
    %v78 = vld [vmem:[%s1 + $0x4] sm:$0xf]
    %v79 = vld [vmem:[%s1 + $0x8] sm:$0xf]
    %v80 = vld [vmem:[%s1 + $0xc] sm:$0xf]
    %v81 = vld [vmem:[%s1 + $0x10] sm:$0xf]
    %v82 = vld [vmem:[%s1 + $0x14] sm:$0xf]
    %v83 = vld [vmem:[%s1 + $0x18] sm:$0xf]
    %v84 = vld [vmem:[%s1 + $0x1c] sm:$0xf]
    %v85 = vld [vmem:[%s1 + $0x20] sm:$0xf]
    %v86 = vld [vmem:[%s1 + $0x24] sm:$0xf]
    %v87 = vld [vmem:[%s1 + $0x28] sm:$0xf]
    %v88 = vld [vmem:[%s1 + $0x2c] sm:$0xf]
    %v89 = vld [vmem:[%s1 + $0x30] sm:$0xf]
    %v90 = vld [vmem:[%s1 + $0x34] sm:$0xf]
    %v91 = vld [vmem:[%s1 + $0x38] sm:$0xf]
    %v92 = vld [vmem:[%s1 + $0x3c] sm:$0xf]
    %v109 = vunpack.c.l.b16 %v77
    %v110 = vunpack.c.l.b16 %v78
    %v111 = vunpack.c.l.b16 %v79
    %v112 = vunpack.c.l.b16 %v80
    %v113 = vunpack.c.l.b16 %v81
    %v114 = vunpack.c.l.b16 %v82
    %v115 = vunpack.c.l.b16 %v83
    %v116 = vunpack.c.l.b16 %v84
    %v117 = vunpack.c.l.b16 %v85
    %v118 = vunpack.c.l.b16 %v86
    %v119 = vunpack.c.l.b16 %v87
    %v120 = vunpack.c.l.b16 %v88
    %v121 = vunpack.c.l.b16 %v89
    %v122 = vunpack.c.l.b16 %v90
    %v123 = vunpack.c.l.b16 %v91
    %v124 = vunpack.c.l.b16 %v92
    %v125 = vpack.c.b16 %v110, %v109
    %v126 = vpack.c.b16 %v112, %v111
    %v127 = vpack.c.b16 %v114, %v113
    %v128 = vpack.c.b16 %v116, %v115
    %v129 = vpack.c.b16 %v118, %v117
    %v130 = vpack.c.b16 %v120, %v119
    %v131 = vpack.c.b16 %v122, %v121
    %v132 = vpack.c.b16 %v124, %v123
    %141 = vmatprep.subr.bf16.mxu0 0
    %142 = vmatpush1.bf16.msra.mxu0 %v125
    %143 = vmatprep.subr.bf16.mxu0 0
    %144 = vmatpush1.bf16.msra.mxu0 %v126
    %145 = vmatprep.subr.bf16.mxu0 0
    %146 = vmatpush1.bf16.msra.mxu0 %v127
    %147 = vmatprep.subr.bf16.mxu0 0
    %148 = vmatpush1.bf16.msra.mxu0 %v128
    %149 = vmatprep.subr.bf16.mxu0 0
    %150 = vmatpush1.bf16.msra.mxu0 %v129
    %151 = vmatprep.subr.bf16.mxu0 0
    %152 = vmatpush1.bf16.msra.mxu0 %v130
    %153 = vmatprep.subr.bf16.mxu0 0
    %154 = vmatpush1.bf16.msra.mxu0 %v131
    %155 = vmatprep.subr.bf16.mxu0 0
    %156 = vmatpush1.bf16.msra.mxu0 %v132
    %157 = vmatprep.subr.bf16.mxu0 0
    %158 = vmatpush1.bf16.msra.mxu0 0
    %159 = vmatprep.subr.bf16.mxu0 0
    %160 = vmatpush1.bf16.msra.mxu0 0
    %161 = vmatprep.subr.bf16.mxu0 0
    %162 = vmatpush1.bf16.msra.mxu0 0
    %163 = vmatprep.subr.bf16.mxu0 0
    %164 = vmatpush1.bf16.msra.mxu0 0
    %165 = vmatprep.subr.bf16.mxu0 0
    %166 = vmatpush1.bf16.msra.mxu0 0
    %167 = vmatprep.subr.bf16.mxu0 0
    %168 = vmatpush1.bf16.msra.mxu0 0
    %169 = vmatprep.subr.bf16.mxu0 0
    %170 = vmatpush1.bf16.msra.mxu0 0
    %171 = vmatprep.subr.bf16.mxu0 0
    %172 = vmatpush1.bf16.msra.mxu0 0
    %173 = vmatprep.mubr.bf16.mxu0 0
    %174 = vmatmul.mubr.bf16.gmra.mrb[0].mxu0 %v69
    %v175 = vpop.f32.mrb[0].mxu0
    %v176 = vadd.f32 0.0, %v175
    %v177 = vpop.f32.mrb[0].mxu0
    %v178 = vpop.f32.mrb[0].mxu0
    %v179 = vadd.f32 0.0, %v178
    %v180 = vpop.f32.mrb[0].mxu0
    %181 = vmatprep.mubr.bf16.mxu0 0
    %182 = vmatmul.mubr.bf16.gmra.mrb[0].mxu0 %v70
    %v183 = vpop.f32.mrb[0].mxu0
    %v184 = vadd.f32 0.0, %v183
    %v185 = vpop.f32.mrb[0].mxu0
    %v186 = vpop.f32.mrb[0].mxu0
    %v187 = vadd.f32 0.0, %v186
    %v188 = vpop.f32.mrb[0].mxu0
    %189 = vmatprep.mubr.bf16.mxu0 0
    %190 = vmatmul.mubr.bf16.gmra.mrb[0].mxu0 %v71
    %v191 = vpop.f32.mrb[0].mxu0
    %v192 = vadd.f32 0.0, %v191
    %v193 = vpop.f32.mrb[0].mxu0
    %v194 = vpop.f32.mrb[0].mxu0
    %v195 = vadd.f32 0.0, %v194
    %v196 = vpop.f32.mrb[0].mxu0
    %197 = vmatprep.mubr.bf16.mxu0 0
    %198 = vmatmul.mubr.bf16.gmra.mrb[0].mxu0 %v72
    %v199 = vpop.f32.mrb[0].mxu0
    %v200 = vadd.f32 0.0, %v199
    %v201 = vpop.f32.mrb[0].mxu0
    %v202 = vpop.f32.mrb[0].mxu0
    %v203 = vadd.f32 0.0, %v202
    %v204 = vpop.f32.mrb[0].mxu0
    %205 = vmatprep.mubr.bf16.mxu0 0
    %206 = vmatmul.mubr.bf16.gmra.mrb[0].mxu0 %v73
    %v207 = vpop.f32.mrb[0].mxu0
    %v208 = vadd.f32 0.0, %v207
    %v209 = vpop.f32.mrb[0].mxu0
    %v210 = vpop.f32.mrb[0].mxu0
    %v211 = vadd.f32 0.0, %v210
    %v212 = vpop.f32.mrb[0].mxu0
    %213 = vmatprep.mubr.bf16.mxu0 0
    %214 = vmatmul.mubr.bf16.gmra.mrb[0].mxu0 %v74
    %v215 = vpop.f32.mrb[0].mxu0
    %v216 = vadd.f32 0.0, %v215
    %v217 = vpop.f32.mrb[0].mxu0
    %v218 = vpop.f32.mrb[0].mxu0
    %v219 = vadd.f32 0.0, %v218
    %v220 = vpop.f32.mrb[0].mxu0
    %221 = vmatprep.mubr.bf16.mxu0 0
    %222 = vmatmul.mubr.bf16.gmra.mrb[0].mxu0 %v75
    %v223 = vpop.f32.mrb[0].mxu0
    %v224 = vadd.f32 0.0, %v223
    %v225 = vpop.f32.mrb[0].mxu0
    %v226 = vpop.f32.mrb[0].mxu0
    %v227 = vadd.f32 0.0, %v226
    %v228 = vpop.f32.mrb[0].mxu0
    %229 = vmatprep.mubr.bf16.mxu0 0
    %230 = vmatmul.mubr.bf16.gmra.mrb[0].mxu0 %v76
    %v231 = vpop.f32.mrb[0].mxu0
    %v232 = vadd.f32 0.0, %v231
    %v233 = vpop.f32.mrb[0].mxu0
    %v234 = vpop.f32.mrb[0].mxu0
    %v235 = vadd.f32 0.0, %v234
    %v236 = vpop.f32.mrb[0].mxu0
    %237 = vdwg.mxu0
    %v238 = vadd.f32 %v49, %v176
    %v239 = vadd.f32 %v50, %v179
    %v240 = vadd.f32 %v51, %v184
    %v241 = vadd.f32 %v52, %v187
    %v242 = vadd.f32 %v53, %v192
    %v243 = vadd.f32 %v54, %v195
    %v244 = vadd.f32 %v55, %v200
    %v245 = vadd.f32 %v56, %v203
    %v246 = vadd.f32 %v57, %v208
    %v247 = vadd.f32 %v58, %v211
    %v248 = vadd.f32 %v59, %v216
    %v249 = vadd.f32 %v60, %v219
    %v250 = vadd.f32 %v61, %v224
    %v251 = vadd.f32 %v62, %v227
    %v252 = vadd.f32 %v63, %v232
    %v253 = vadd.f32 %v64, %v235
    %vm254 = vcmask 130048
    %255 = vst.msk [vmem:[#allocation2] sm:$0xff] %vm254, %v238
    %256 = vst.msk [vmem:[#allocation2 + $0x8] sm:$0xff] %vm254, %v239
    %257 = vst.msk [vmem:[#allocation2 + $0x10] sm:$0xff] %vm254, %v240
    %258 = vst.msk [vmem:[#allocation2 + $0x18] sm:$0xff] %vm254, %v241
    %259 = vst.msk [vmem:[#allocation2 + $0x20] sm:$0xff] %vm254, %v242
    %260 = vst.msk [vmem:[#allocation2 + $0x28] sm:$0xff] %vm254, %v243
    %261 = vst.msk [vmem:[#allocation2 + $0x30] sm:$0xff] %vm254, %v244
    %262 = vst.msk [vmem:[#allocation2 + $0x38] sm:$0xff] %vm254, %v245
    %263 = vst.msk [vmem:[#allocation2 + $0x40] sm:$0xff] %vm254, %v246
    %264 = vst.msk [vmem:[#allocation2 + $0x48] sm:$0xff] %vm254, %v247
    %265 = vst.msk [vmem:[#allocation2 + $0x50] sm:$0xff] %vm254, %v248
    %266 = vst.msk [vmem:[#allocation2 + $0x58] sm:$0xff] %vm254, %v249
    %267 = vst.msk [vmem:[#allocation2 + $0x60] sm:$0xff] %vm254, %v250
    %268 = vst.msk [vmem:[#allocation2 + $0x68] sm:$0xff] %vm254, %v251
    %269 = vst.msk [vmem:[#allocation2 + $0x70] sm:$0xff] %vm254, %v252
    %270 = vst.msk [vmem:[#allocation2 + $0x78] sm:$0xff] %vm254, %v253
    // Predicated region
    $region34: #{tpu_custom_call.1} parent=1 // pred_check
      %p271 = pneg %p28
    $region35: #{tpu_custom_call.1} parent=1 // pred_check_branch
      %273 = sbr.rel (%p271) target = $region37
    $region36: #{tpu_custom_call.1} parent=1 // pred_region
      %v274 = vld [vmem:[#allocation2] sm:$0xff]
      %v275 = vld [vmem:[#allocation2 + $0x8] sm:$0xff]
      %v276 = vld [vmem:[#allocation2 + $0x10] sm:$0xff]
      %v277 = vld [vmem:[#allocation2 + $0x18] sm:$0xff]
      %v278 = vld [vmem:[#allocation2 + $0x20] sm:$0xff]
      %v279 = vld [vmem:[#allocation2 + $0x28] sm:$0xff]
      %v280 = vld [vmem:[#allocation2 + $0x30] sm:$0xff]
      %v281 = vld [vmem:[#allocation2 + $0x38] sm:$0xff]
      %v282 = vld [vmem:[#allocation2 + $0x40] sm:$0xff]
      %v283 = vld [vmem:[#allocation2 + $0x48] sm:$0xff]
      %v284 = vld [vmem:[#allocation2 + $0x50] sm:$0xff]
      %v285 = vld [vmem:[#allocation2 + $0x58] sm:$0xff]
      %v286 = vld [vmem:[#allocation2 + $0x60] sm:$0xff]
      %v287 = vld [vmem:[#allocation2 + $0x68] sm:$0xff]
      %v288 = vld [vmem:[#allocation2 + $0x70] sm:$0xff]
      %v289 = vld [vmem:[#allocation2 + $0x78] sm:$0xff]
      %v290 = vld [vmem:[%s3] sm:$0xff]
      %v291 = vld [vmem:[%s3 + $0x8] sm:$0xff]
      %v292 = vld [vmem:[%s3 + $0x10] sm:$0xff]
      %v293 = vld [vmem:[%s3 + $0x18] sm:$0xff]
      %v294 = vld [vmem:[%s3 + $0x20] sm:$0xff]
      %v295 = vld [vmem:[%s3 + $0x28] sm:$0xff]
      %v296 = vld [vmem:[%s3 + $0x30] sm:$0xff]
      %v297 = vld [vmem:[%s3 + $0x38] sm:$0xff]
      %v298 = vld [vmem:[%s3 + $0x40] sm:$0xff]
      %v299 = vld [vmem:[%s3 + $0x48] sm:$0xff]
      %v300 = vld [vmem:[%s3 + $0x50] sm:$0xff]
      %v301 = vld [vmem:[%s3 + $0x58] sm:$0xff]
      %v302 = vld [vmem:[%s3 + $0x60] sm:$0xff]
      %v303 = vld [vmem:[%s3 + $0x68] sm:$0xff]
      %v304 = vld [vmem:[%s3 + $0x70] sm:$0xff]
      %v305 = vld [vmem:[%s3 + $0x78] sm:$0xff]
      %307 = vset.pattern.permute.xlu0 0
      %308 = vperm.xlu0 %307, %v290
      %v309 = vpop.permute.xlu0 %308
      %312 = vset.pattern.permute.xlu0 0
      %313 = vperm.xlu0 %312, %v291
      %v314 = vpop.permute.xlu0 %313
      %317 = vset.pattern.permute.xlu0 0
      %318 = vperm.xlu0 %317, %v292
      %v319 = vpop.permute.xlu0 %318
      %322 = vset.pattern.permute.xlu0 0
      %323 = vperm.xlu0 %322, %v293
      %v324 = vpop.permute.xlu0 %323
      %327 = vset.pattern.permute.xlu0 0
      %328 = vperm.xlu0 %327, %v294
      %v329 = vpop.permute.xlu0 %328
      %332 = vset.pattern.permute.xlu0 0
      %333 = vperm.xlu0 %332, %v295
      %v334 = vpop.permute.xlu0 %333
      %337 = vset.pattern.permute.xlu0 0
      %338 = vperm.xlu0 %337, %v296
      %v339 = vpop.permute.xlu0 %338
      %342 = vset.pattern.permute.xlu0 0
      %343 = vperm.xlu0 %342, %v297
      %v344 = vpop.permute.xlu0 %343
      %347 = vset.pattern.permute.xlu0 0
      %348 = vperm.xlu0 %347, %v298
      %v349 = vpop.permute.xlu0 %348
      %352 = vset.pattern.permute.xlu0 0
      %353 = vperm.xlu0 %352, %v299
      %v354 = vpop.permute.xlu0 %353
      %357 = vset.pattern.permute.xlu0 0
      %358 = vperm.xlu0 %357, %v300
      %v359 = vpop.permute.xlu0 %358
      %362 = vset.pattern.permute.xlu0 0
      %363 = vperm.xlu0 %362, %v301
      %v364 = vpop.permute.xlu0 %363
      %367 = vset.pattern.permute.xlu0 0
      %368 = vperm.xlu0 %367, %v302
      %v369 = vpop.permute.xlu0 %368
      %372 = vset.pattern.permute.xlu0 0
      %373 = vperm.xlu0 %372, %v303
      %v374 = vpop.permute.xlu0 %373
      %377 = vset.pattern.permute.xlu0 0
      %378 = vperm.xlu0 %377, %v304
      %v379 = vpop.permute.xlu0 %378
      %382 = vset.pattern.permute.xlu0 0
      %383 = vperm.xlu0 %382, %v305
      %v384 = vpop.permute.xlu0 %383
      %v386 = vmul.f32 %v274, %v309
      %v387 = vmul.f32 %v275, %v314
      %v388 = vmul.f32 %v276, %v319
      %v389 = vmul.f32 %v277, %v324
      %v390 = vmul.f32 %v278, %v329
      %v391 = vmul.f32 %v279, %v334
      %v392 = vmul.f32 %v280, %v339
      %v393 = vmul.f32 %v281, %v344
      %v394 = vmul.f32 %v282, %v349
      %v395 = vmul.f32 %v283, %v354
      %v396 = vmul.f32 %v284, %v359
      %v397 = vmul.f32 %v285, %v364
      %v398 = vmul.f32 %v286, %v369
      %v399 = vmul.f32 %v287, %v374
      %v400 = vmul.f32 %v288, %v379
      %v401 = vmul.f32 %v289, %v384
      %v402 = vld [vmem:[%s4] sm:$0xff]
      %v403 = vld [vmem:[%s4 + $0x8] sm:$0xff]
      %v404 = vld [vmem:[%s2] sm:$0xf]
      %v405 = vld [vmem:[%s2 + $0x4] sm:$0xf]
      %v406 = vld [vmem:[%s2 + $0x8] sm:$0xf]
      %v407 = vld [vmem:[%s2 + $0xc] sm:$0xf]
      %v408 = vld [vmem:[%s2 + $0x10] sm:$0xf]
      %v409 = vld [vmem:[%s2 + $0x14] sm:$0xf]
      %v410 = vld [vmem:[%s2 + $0x18] sm:$0xf]
      %v411 = vld [vmem:[%s2 + $0x1c] sm:$0xf]
      %v412 = vld [vmem:[%s2 + $0x20] sm:$0xf]
      %v413 = vld [vmem:[%s2 + $0x24] sm:$0xf]
      %v414 = vld [vmem:[%s2 + $0x28] sm:$0xf]
      %v415 = vld [vmem:[%s2 + $0x2c] sm:$0xf]
      %v416 = vld [vmem:[%s2 + $0x30] sm:$0xf]
      %v417 = vld [vmem:[%s2 + $0x34] sm:$0xf]
      %v418 = vld [vmem:[%s2 + $0x38] sm:$0xf]
      %v419 = vld [vmem:[%s2 + $0x3c] sm:$0xf]
      %v420 = vunpack.c.l.bf16 %v404
      %v421 = vunpack.c.l.bf16 %v405
      %v422 = vunpack.c.l.bf16 %v406
      %v423 = vunpack.c.l.bf16 %v407
      %v424 = vunpack.c.l.bf16 %v408
      %v425 = vunpack.c.l.bf16 %v409
      %v426 = vunpack.c.l.bf16 %v410
      %v427 = vunpack.c.l.bf16 %v411
      %v428 = vunpack.c.l.bf16 %v412
      %v429 = vunpack.c.l.bf16 %v413
      %v430 = vunpack.c.l.bf16 %v414
      %v431 = vunpack.c.l.bf16 %v415
      %v432 = vunpack.c.l.bf16 %v416
      %v433 = vunpack.c.l.bf16 %v417
      %v434 = vunpack.c.l.bf16 %v418
      %v435 = vunpack.c.l.bf16 %v419
      %v436 = vld [vmem:[%s5] sm:$0xff]
      %v437 = vld [vmem:[%s5 + $0x8] sm:$0xff]
      %v439 = vsel %vm254, %v420, 0
      %v442 = vsel %vm254, %v421, 0
      %v445 = vsel %vm254, %v422, 0
      %v448 = vsel %vm254, %v423, 0
      %v451 = vsel %vm254, %v424, 0
      %v454 = vsel %vm254, %v425, 0
      %v457 = vsel %vm254, %v426, 0
      %v460 = vsel %vm254, %v427, 0
      %v463 = vsel %vm254, %v428, 0
      %v466 = vsel %vm254, %v429, 0
      %v469 = vsel %vm254, %v430, 0
      %v472 = vsel %vm254, %v431, 0
      %v475 = vsel %vm254, %v432, 0
      %v478 = vsel %vm254, %v433, 0
      %v481 = vsel %vm254, %v434, 0
      %v484 = vsel %vm254, %v435, 0
      %486 = vmatprep.subr.mxu0 0.0
      %487 = vmatpush1.msra.mxu0 %v436
      %488 = vmatprep.subr.mxu0 0.0
      %489 = vmatpush1.msra.mxu0 %v437
      %490 = vmatprep.subr.mxu0 0.0
      %491 = vmatpush1.msra.mxu0 0.0
      %492 = vmatprep.subr.mxu0 0.0
      %493 = vmatpush1.msra.mxu0 0.0
      %494 = vmatprep.subr.mxu0 0.0
      %495 = vmatpush1.msra.mxu0 0.0
      %496 = vmatprep.subr.mxu0 0.0
      %497 = vmatpush1.msra.mxu0 0.0
      %498 = vmatprep.subr.mxu0 0.0
      %499 = vmatpush1.msra.mxu0 0.0
      %500 = vmatprep.subr.mxu0 0.0
      %501 = vmatpush1.msra.mxu0 0.0
      %502 = vmatprep.subr.mxu0 0.0
      %503 = vmatpush1.msra.mxu0 0.0
      %504 = vmatprep.subr.mxu0 0.0
      %505 = vmatpush1.msra.mxu0 0.0
      %506 = vmatprep.subr.mxu0 0.0
      %507 = vmatpush1.msra.mxu0 0.0
      %508 = vmatprep.subr.mxu0 0.0
      %509 = vmatpush1.msra.mxu0 0.0
      %510 = vmatprep.subr.mxu0 0.0
      %511 = vmatpush1.msra.mxu0 0.0
      %512 = vmatprep.subr.mxu0 0.0
      %513 = vmatpush1.msra.mxu0 0.0
      %514 = vmatprep.subr.mxu0 0.0
      %515 = vmatpush1.msra.mxu0 0.0
      %516 = vmatprep.subr.mxu0 0.0
      %517 = vmatpush1.msra.mxu0 0.0
      %518 = vmatprep.subr.mxu0 0.0
      %519 = vmatpush1.msra.mxu0 0.0
      %520 = vmatprep.subr.mxu0 0.0
      %521 = vmatpush1.msra.mxu0 0.0
      %522 = vmatprep.subr.mxu0 0.0
      %523 = vmatpush1.msra.mxu0 0.0
      %524 = vmatprep.subr.mxu0 0.0
      %525 = vmatpush1.msra.mxu0 0.0
      %526 = vmatprep.subr.mxu0 0.0
      %527 = vmatpush1.msra.mxu0 0.0
      %528 = vmatprep.subr.mxu0 0.0
      %529 = vmatpush1.msra.mxu0 0.0
      %530 = vmatprep.subr.mxu0 0.0
      %531 = vmatpush1.msra.mxu0 0.0
      %532 = vmatprep.subr.mxu0 0.0
      %533 = vmatpush1.msra.mxu0 0.0
      %534 = vmatprep.subr.mxu0 0.0
      %535 = vmatpush1.msra.mxu0 0.0
      %536 = vmatprep.subr.mxu0 0.0
      %537 = vmatpush1.msra.mxu0 0.0
      %538 = vmatprep.subr.mxu0 0.0
      %539 = vmatpush1.msra.mxu0 0.0
      %540 = vmatprep.subr.mxu0 0.0
      %541 = vmatpush1.msra.mxu0 0.0
      %542 = vmatprep.subr.mxu0 0.0
      %543 = vmatpush1.msra.mxu0 0.0
      %544 = vmatprep.subr.mxu0 0.0
      %545 = vmatpush1.msra.mxu0 0.0
      %546 = vmatprep.subr.mxu0 0.0
      %547 = vmatpush1.msra.mxu0 0.0
      %548 = vmatprep.subr.mxu0 0.0
      %549 = vmatpush1.msra.mxu0 0.0
      %550 = vmatprep.mubr.f32.mxu0 0.0
      %551 = vmatmul.mubr.f32.gmra.mrb[0].mxu0 %v439
      %v552 = vpop.f32.mrb[0].mxu0
      %v553 = vadd.f32 0.0, %v552
      %v554 = vpop.f32.mrb[0].mxu0
      %555 = vmatprep.mubr.f32.mxu0 0.0
      %556 = vmatmul.mubr.f32.gmra.mrb[0].mxu0 %v442
      %v557 = vpop.f32.mrb[0].mxu0
      %v558 = vadd.f32 0.0, %v557
      %v559 = vpop.f32.mrb[0].mxu0
      %560 = vmatprep.mubr.f32.mxu0 0.0
      %561 = vmatmul.mubr.f32.gmra.mrb[0].mxu0 %v445
      %v562 = vpop.f32.mrb[0].mxu0
      %v563 = vadd.f32 0.0, %v562
      %v564 = vpop.f32.mrb[0].mxu0
      %565 = vmatprep.mubr.f32.mxu0 0.0
      %566 = vmatmul.mubr.f32.gmra.mrb[0].mxu0 %v448
      %v567 = vpop.f32.mrb[0].mxu0
      %v568 = vadd.f32 0.0, %v567
      %v569 = vpop.f32.mrb[0].mxu0
      %570 = vmatprep.mubr.f32.mxu0 0.0
      %571 = vmatmul.mubr.f32.gmra.mrb[0].mxu0 %v451
      %v572 = vpop.f32.mrb[0].mxu0
      %v573 = vadd.f32 0.0, %v572
      %v574 = vpop.f32.mrb[0].mxu0
      %575 = vmatprep.mubr.f32.mxu0 0.0
      %576 = vmatmul.mubr.f32.gmra.mrb[0].mxu0 %v454
      %v577 = vpop.f32.mrb[0].mxu0
      %v578 = vadd.f32 0.0, %v577
      %v579 = vpop.f32.mrb[0].mxu0
      %580 = vmatprep.mubr.f32.mxu0 0.0
      %581 = vmatmul.mubr.f32.gmra.mrb[0].mxu0 %v457
      %v582 = vpop.f32.mrb[0].mxu0
      %v583 = vadd.f32 0.0, %v582
      %v584 = vpop.f32.mrb[0].mxu0
      %585 = vmatprep.mubr.f32.mxu0 0.0
      %586 = vmatmul.mubr.f32.gmra.mrb[0].mxu0 %v460
      %v587 = vpop.f32.mrb[0].mxu0
      %v588 = vadd.f32 0.0, %v587
      %v589 = vpop.f32.mrb[0].mxu0
      %590 = vmatprep.mubr.f32.mxu0 0.0
      %591 = vmatmul.mubr.f32.gmra.mrb[0].mxu0 %v463
      %v592 = vpop.f32.mrb[0].mxu0
      %v593 = vadd.f32 0.0, %v592
      %v594 = vpop.f32.mrb[0].mxu0
      %595 = vmatprep.mubr.f32.mxu0 0.0
      %596 = vmatmul.mubr.f32.gmra.mrb[0].mxu0 %v466
      %v597 = vpop.f32.mrb[0].mxu0
      %v598 = vadd.f32 0.0, %v597
      %v599 = vpop.f32.mrb[0].mxu0
      %600 = vmatprep.mubr.f32.mxu0 0.0
      %601 = vmatmul.mubr.f32.gmra.mrb[0].mxu0 %v469
      %v602 = vpop.f32.mrb[0].mxu0
      %v603 = vadd.f32 0.0, %v602
      %v604 = vpop.f32.mrb[0].mxu0
      %605 = vmatprep.mubr.f32.mxu0 0.0
      %606 = vmatmul.mubr.f32.gmra.mrb[0].mxu0 %v472
      %v607 = vpop.f32.mrb[0].mxu0
      %v608 = vadd.f32 0.0, %v607
      %v609 = vpop.f32.mrb[0].mxu0
      %610 = vmatprep.mubr.f32.mxu0 0.0
      %611 = vmatmul.mubr.f32.gmra.mrb[0].mxu0 %v475
      %v612 = vpop.f32.mrb[0].mxu0
      %v613 = vadd.f32 0.0, %v612
      %v614 = vpop.f32.mrb[0].mxu0
      %615 = vmatprep.mubr.f32.mxu0 0.0
      %616 = vmatmul.mubr.f32.gmra.mrb[0].mxu0 %v478
      %v617 = vpop.f32.mrb[0].mxu0
      %v618 = vadd.f32 0.0, %v617
      %v619 = vpop.f32.mrb[0].mxu0
      %620 = vmatprep.mubr.f32.mxu0 0.0
      %621 = vmatmul.mubr.f32.gmra.mrb[0].mxu0 %v481
      %v622 = vpop.f32.mrb[0].mxu0
      %v623 = vadd.f32 0.0, %v622
      %v624 = vpop.f32.mrb[0].mxu0
      %625 = vmatprep.mubr.f32.mxu0 0.0
      %626 = vmatmul.mubr.f32.gmra.mrb[0].mxu0 %v484
      %v627 = vpop.f32.mrb[0].mxu0
      %v628 = vadd.f32 0.0, %v627
      %v629 = vpop.f32.mrb[0].mxu0
      %630 = vdwg.mxu0
      %v632 = vsel %vm254, %v386, 0
      %v635 = vsel %vm254, %v387, 0
      %v638 = vsel %vm254, %v388, 0
      %v641 = vsel %vm254, %v389, 0
      %v644 = vsel %vm254, %v390, 0
      %v647 = vsel %vm254, %v391, 0
      %v650 = vsel %vm254, %v392, 0
      %v653 = vsel %vm254, %v393, 0
      %v656 = vsel %vm254, %v394, 0
      %v659 = vsel %vm254, %v395, 0
      %v662 = vsel %vm254, %v396, 0
      %v665 = vsel %vm254, %v397, 0
      %v668 = vsel %vm254, %v398, 0
      %v671 = vsel %vm254, %v399, 0
      %v674 = vsel %vm254, %v400, 0
      %v677 = vsel %vm254, %v401, 0
      %679 = vmatprep.subr.mxu0 0.0
      %680 = vmatpush1.msra.mxu0 %v402
      %681 = vmatprep.subr.mxu0 0.0
      %682 = vmatpush1.msra.mxu0 %v403
      %683 = vmatprep.subr.mxu0 0.0
      %684 = vmatpush1.msra.mxu0 0.0
      %685 = vmatprep.subr.mxu0 0.0
      %686 = vmatpush1.msra.mxu0 0.0
      %687 = vmatprep.subr.mxu0 0.0
      %688 = vmatpush1.msra.mxu0 0.0
      %689 = vmatprep.subr.mxu0 0.0
      %690 = vmatpush1.msra.mxu0 0.0
      %691 = vmatprep.subr.mxu0 0.0
      %692 = vmatpush1.msra.mxu0 0.0
      %693 = vmatprep.subr.mxu0 0.0
      %694 = vmatpush1.msra.mxu0 0.0
      %695 = vmatprep.subr.mxu0 0.0
      %696 = vmatpush1.msra.mxu0 0.0
      %697 = vmatprep.subr.mxu0 0.0
      %698 = vmatpush1.msra.mxu0 0.0
      %699 = vmatprep.subr.mxu0 0.0
      %700 = vmatpush1.msra.mxu0 0.0
      %701 = vmatprep.subr.mxu0 0.0
      %702 = vmatpush1.msra.mxu0 0.0
      %703 = vmatprep.subr.mxu0 0.0
      %704 = vmatpush1.msra.mxu0 0.0
      %705 = vmatprep.subr.mxu0 0.0
      %706 = vmatpush1.msra.mxu0 0.0
      %707 = vmatprep.subr.mxu0 0.0
      %708 = vmatpush1.msra.mxu0 0.0
      %709 = vmatprep.subr.mxu0 0.0
      %710 = vmatpush1.msra.mxu0 0.0
      %711 = vmatprep.subr.mxu0 0.0
      %712 = vmatpush1.msra.mxu0 0.0
      %713 = vmatprep.subr.mxu0 0.0
      %714 = vmatpush1.msra.mxu0 0.0
      %715 = vmatprep.subr.mxu0 0.0
      %716 = vmatpush1.msra.mxu0 0.0
      %717 = vmatprep.subr.mxu0 0.0
      %718 = vmatpush1.msra.mxu0 0.0
      %719 = vmatprep.subr.mxu0 0.0
      %720 = vmatpush1.msra.mxu0 0.0
      %721 = vmatprep.subr.mxu0 0.0
      %722 = vmatpush1.msra.mxu0 0.0
      %723 = vmatprep.subr.mxu0 0.0
      %724 = vmatpush1.msra.mxu0 0.0
      %725 = vmatprep.subr.mxu0 0.0
      %726 = vmatpush1.msra.mxu0 0.0
      %727 = vmatprep.subr.mxu0 0.0
      %728 = vmatpush1.msra.mxu0 0.0
      %729 = vmatprep.subr.mxu0 0.0
      %730 = vmatpush1.msra.mxu0 0.0
      %731 = vmatprep.subr.mxu0 0.0
      %732 = vmatpush1.msra.mxu0 0.0
      %733 = vmatprep.subr.mxu0 0.0
      %734 = vmatpush1.msra.mxu0 0.0
      %735 = vmatprep.subr.mxu0 0.0
      %736 = vmatpush1.msra.mxu0 0.0
      %737 = vmatprep.subr.mxu0 0.0
      %738 = vmatpush1.msra.mxu0 0.0
      %739 = vmatprep.subr.mxu0 0.0
      %740 = vmatpush1.msra.mxu0 0.0
      %741 = vmatprep.subr.mxu0 0.0
      %742 = vmatpush1.msra.mxu0 0.0
      %743 = vmatprep.mubr.f32.mxu0 0.0
      %744 = vmatmul.mubr.f32.gmra.mrb[0].mxu0 %v632
      %v745 = vpop.f32.mrb[0].mxu0
      %v746 = vadd.f32 %v553, %v745
      %v747 = vpop.f32.mrb[0].mxu0
      %748 = vmatprep.mubr.f32.mxu0 0.0
      %749 = vmatmul.mubr.f32.gmra.mrb[0].mxu0 %v635
      %v750 = vpop.f32.mrb[0].mxu0
      %v751 = vadd.f32 %v558, %v750
      %v752 = vpop.f32.mrb[0].mxu0
      %753 = vmatprep.mubr.f32.mxu0 0.0
      %754 = vmatmul.mubr.f32.gmra.mrb[0].mxu0 %v638
      %v755 = vpop.f32.mrb[0].mxu0
      %v756 = vadd.f32 %v563, %v755
      %v757 = vpop.f32.mrb[0].mxu0
      %758 = vmatprep.mubr.f32.mxu0 0.0
      %759 = vmatmul.mubr.f32.gmra.mrb[0].mxu0 %v641
      %v760 = vpop.f32.mrb[0].mxu0
      %v761 = vadd.f32 %v568, %v760
      %v762 = vpop.f32.mrb[0].mxu0
      %763 = vmatprep.mubr.f32.mxu0 0.0
      %764 = vmatmul.mubr.f32.gmra.mrb[0].mxu0 %v644
      %v765 = vpop.f32.mrb[0].mxu0
      %v766 = vadd.f32 %v573, %v765
      %v767 = vpop.f32.mrb[0].mxu0
      %768 = vmatprep.mubr.f32.mxu0 0.0
      %769 = vmatmul.mubr.f32.gmra.mrb[0].mxu0 %v647
      %v770 = vpop.f32.mrb[0].mxu0
      %v771 = vadd.f32 %v578, %v770
      %v772 = vpop.f32.mrb[0].mxu0
      %773 = vmatprep.mubr.f32.mxu0 0.0
      %774 = vmatmul.mubr.f32.gmra.mrb[0].mxu0 %v650
      %v775 = vpop.f32.mrb[0].mxu0
      %v776 = vadd.f32 %v583, %v775
      %v777 = vpop.f32.mrb[0].mxu0
      %778 = vmatprep.mubr.f32.mxu0 0.0
      %779 = vmatmul.mubr.f32.gmra.mrb[0].mxu0 %v653
      %v780 = vpop.f32.mrb[0].mxu0
      %v781 = vadd.f32 %v588, %v780
      %v782 = vpop.f32.mrb[0].mxu0
      %783 = vmatprep.mubr.f32.mxu0 0.0
      %784 = vmatmul.mubr.f32.gmra.mrb[0].mxu0 %v656
      %v785 = vpop.f32.mrb[0].mxu0
      %v786 = vadd.f32 %v593, %v785
      %v787 = vpop.f32.mrb[0].mxu0
      %788 = vmatprep.mubr.f32.mxu0 0.0
      %789 = vmatmul.mubr.f32.gmra.mrb[0].mxu0 %v659
      %v790 = vpop.f32.mrb[0].mxu0
      %v791 = vadd.f32 %v598, %v790
      %v792 = vpop.f32.mrb[0].mxu0
      %793 = vmatprep.mubr.f32.mxu0 0.0
      %794 = vmatmul.mubr.f32.gmra.mrb[0].mxu0 %v662
      %v795 = vpop.f32.mrb[0].mxu0
      %v796 = vadd.f32 %v603, %v795
      %v797 = vpop.f32.mrb[0].mxu0
      %798 = vmatprep.mubr.f32.mxu0 0.0
      %799 = vmatmul.mubr.f32.gmra.mrb[0].mxu0 %v665
      %v800 = vpop.f32.mrb[0].mxu0
      %v801 = vadd.f32 %v608, %v800
      %v802 = vpop.f32.mrb[0].mxu0
      %803 = vmatprep.mubr.f32.mxu0 0.0
      %804 = vmatmul.mubr.f32.gmra.mrb[0].mxu0 %v668
      %v805 = vpop.f32.mrb[0].mxu0
      %v806 = vadd.f32 %v613, %v805
      %v807 = vpop.f32.mrb[0].mxu0
      %808 = vmatprep.mubr.f32.mxu0 0.0
      %809 = vmatmul.mubr.f32.gmra.mrb[0].mxu0 %v671
      %v810 = vpop.f32.mrb[0].mxu0
      %v811 = vadd.f32 %v618, %v810
      %v812 = vpop.f32.mrb[0].mxu0
      %813 = vmatprep.mubr.f32.mxu0 0.0
      %814 = vmatmul.mubr.f32.gmra.mrb[0].mxu0 %v674
      %v815 = vpop.f32.mrb[0].mxu0
      %v816 = vadd.f32 %v623, %v815
      %v817 = vpop.f32.mrb[0].mxu0
      %818 = vmatprep.mubr.f32.mxu0 0.0
      %819 = vmatmul.mubr.f32.gmra.mrb[0].mxu0 %v677
      %v820 = vpop.f32.mrb[0].mxu0
      %v821 = vadd.f32 %v628, %v820
      %v822 = vpop.f32.mrb[0].mxu0
      %823 = vdwg.mxu0
      %v824 = vld [vmem:[%s6] sm:$0x1]
      %v826 = vlaneseq
      %v827 = vshrl.u32 %v826, 7
      %v828 = vsub.s32 0, %v827
      %v829 = vrot.slane %v824, %v828
      %v831 = vadd.f32 %v746, %v829
      %v832 = vadd.f32 %v751, %v829
      %v833 = vadd.f32 %v756, %v829
      %v834 = vadd.f32 %v761, %v829
      %v835 = vadd.f32 %v766, %v829
      %v836 = vadd.f32 %v771, %v829
      %v837 = vadd.f32 %v776, %v829
      %v838 = vadd.f32 %v781, %v829
      %v839 = vadd.f32 %v786, %v829
      %v840 = vadd.f32 %v791, %v829
      %v841 = vadd.f32 %v796, %v829
      %v842 = vadd.f32 %v801, %v829
      %v843 = vadd.f32 %v806, %v829
      %v844 = vadd.f32 %v811, %v829
      %v845 = vadd.f32 %v816, %v829
      %v846 = vadd.f32 %v821, %v829
      %v847 = vmax.f32 %v831, 0.0
      %v848 = vmax.f32 %v832, 0.0
      %v849 = vmax.f32 %v833, 0.0
      %v850 = vmax.f32 %v834, 0.0
      %v851 = vmax.f32 %v835, 0.0
      %v852 = vmax.f32 %v836, 0.0
      %v853 = vmax.f32 %v837, 0.0
      %v854 = vmax.f32 %v838, 0.0
      %v855 = vmax.f32 %v839, 0.0
      %v856 = vmax.f32 %v840, 0.0
      %v857 = vmax.f32 %v841, 0.0
      %v858 = vmax.f32 %v842, 0.0
      %v859 = vmax.f32 %v843, 0.0
      %v860 = vmax.f32 %v844, 0.0
      %v861 = vmax.f32 %v845, 0.0
      %v862 = vmax.f32 %v846, 0.0
      %v863 = vpack.c.bf16 %v848, %v847
      %v864 = vpack.c.bf16 %v850, %v849
      %v865 = vpack.c.bf16 %v852, %v851
      %v866 = vpack.c.bf16 %v854, %v853
      %v867 = vpack.c.bf16 %v856, %v855
      %v868 = vpack.c.bf16 %v858, %v857
      %v869 = vpack.c.bf16 %v860, %v859
      %v870 = vpack.c.bf16 %v862, %v861
      %v879 = vunpack.c.l.b16 %v863
      %v880 = vunpack.c.h.b16 %v863
      %v881 = vunpack.c.l.b16 %v864
      %v882 = vunpack.c.h.b16 %v864
      %v883 = vunpack.c.l.b16 %v865
      %v884 = vunpack.c.h.b16 %v865
      %v885 = vunpack.c.l.b16 %v866
      %v886 = vunpack.c.h.b16 %v866
      %v887 = vunpack.c.l.b16 %v867
      %v888 = vunpack.c.h.b16 %v867
      %v889 = vunpack.c.l.b16 %v868
      %v890 = vunpack.c.h.b16 %v868
      %v891 = vunpack.c.l.b16 %v869
      %v892 = vunpack.c.h.b16 %v869
      %v893 = vunpack.c.l.b16 %v870
      %v894 = vunpack.c.h.b16 %v870
      %v895 = vpack.c.b16 %v879, %v879
      %v896 = vpack.c.b16 %v880, %v880
      %v897 = vpack.c.b16 %v881, %v881
      %v898 = vpack.c.b16 %v882, %v882
      %v899 = vpack.c.b16 %v883, %v883
      %v900 = vpack.c.b16 %v884, %v884
      %v901 = vpack.c.b16 %v885, %v885
      %v902 = vpack.c.b16 %v886, %v886
      %v903 = vpack.c.b16 %v887, %v887
      %v904 = vpack.c.b16 %v888, %v888
      %v905 = vpack.c.b16 %v889, %v889
      %v906 = vpack.c.b16 %v890, %v890
      %v907 = vpack.c.b16 %v891, %v891
      %v908 = vpack.c.b16 %v892, %v892
      %v909 = vpack.c.b16 %v893, %v893
      %v910 = vpack.c.b16 %v894, %v894
      %927 = vst [vmem:[#allocation3] sm:$0xf] %v895
      %928 = vst [vmem:[#allocation3 + $0x4] sm:$0xf] %v896
      %929 = vst [vmem:[#allocation3 + $0x8] sm:$0xf] %v897
      %930 = vst [vmem:[#allocation3 + $0xc] sm:$0xf] %v898
      %931 = vst [vmem:[#allocation3 + $0x10] sm:$0xf] %v899
      %932 = vst [vmem:[#allocation3 + $0x14] sm:$0xf] %v900
      %933 = vst [vmem:[#allocation3 + $0x18] sm:$0xf] %v901
      %934 = vst [vmem:[#allocation3 + $0x1c] sm:$0xf] %v902
      %935 = vst [vmem:[#allocation3 + $0x20] sm:$0xf] %v903
      %936 = vst [vmem:[#allocation3 + $0x24] sm:$0xf] %v904
      %937 = vst [vmem:[#allocation3 + $0x28] sm:$0xf] %v905
      %938 = vst [vmem:[#allocation3 + $0x2c] sm:$0xf] %v906
      %939 = vst [vmem:[#allocation3 + $0x30] sm:$0xf] %v907
      %940 = vst [vmem:[#allocation3 + $0x34] sm:$0xf] %v908
      %941 = vst [vmem:[#allocation3 + $0x38] sm:$0xf] %v909
      %942 = vst [vmem:[#allocation3 + $0x3c] sm:$0xf] %v910
    $region37: #{tpu_custom_call.1} parent=1 // pred_fallthru
      _
    // Predicated region
    $region38: #{tpu_custom_call.1} parent=1 // pred_check
      _
    $region39: #{tpu_custom_call.1} parent=1 // pred_check_branch
      %944 = sbr.rel (0) target = $region41
    $region40: #{tpu_custom_call.1} parent=1 // pred_region
      %s946 = ssub.s32 1024, 1024
      %947 = vsyncadd [#allocation4], %s946
      %s948 = sshll.u32 [#allocation3], 4
      %s949 = int_to_ptr.vmem [resolvable:$true] %s948
      %954 = dma.vmem_to_hbm [thread:$0]  %s949, 1024, %s7, [#allocation4], 64, 64, 4
    $region41: #{tpu_custom_call.1} parent=1 // pred_fallthru
      _
    // Predicated region
    $region42: #{tpu_custom_call.1} parent=1 // pred_check
      _
    $region43: #{tpu_custom_call.1} parent=1 // pred_check_branch
      %956 = sbr.rel (0) target = $region45
    $region44: #{tpu_custom_call.1} parent=1 // pred_region
      %957 = dma.done [#allocation4], 1024
    $region45: #{tpu_custom_call.1} parent=1 // pred_fallthru
      _
    %958 = vsyncpa [#allocation4], 1

</llo_original>
